<compile_context>
chip_gen: v7x
topology: tpu7x:2x2x1
jax: 0.10.0
libtpu: 0.0.40
codegen_flags: <defaults>
</compile_context>

<pallas_src>
import functools

import jax
import jax.numpy as jnp
import numpy as np
from jax.experimental import pallas as pl
from jax.experimental.pallas import tpu as pltpu


def _pe_kernel(p_ref, o_ref, *, level: int, recompute_every: int):
    # p_ref: (tr, 128) lane-dense tile of flattened coordinates.
    # o_ref: (1 + 2*level, tr, 128) frequency slabs (slab-major, lane-dense).
    x = p_ref[...].astype(jnp.float32)
    o_ref[0, :, :] = x.astype(o_ref.dtype)
    s = c = None
    for i in range(level):
        if i % recompute_every == 0:
            a = x * float(2 ** i)           # pi = 1.0 in the reference module
            s = jnp.sin(a)
            c = jnp.cos(a)
        else:
            # angle doubling: sin(2a) = 2 s c ; cos(2a) = (c - s)(c + s)
            s, c = 2.0 * (s * c), (c - s) * (c + s)
        o_ref[1 + 2 * i, :, :] = s.astype(o_ref.dtype)
        o_ref[2 + 2 * i, :, :] = c.astype(o_ref.dtype)


def positional_encoding(p: jax.Array, level: int = 10, *,
                        block_rows: int = 512,
                        recompute_every: int = 3) -> jax.Array:
    """Pallas equivalent of PositionalEncoding.forward. p: (..., D)."""
    *lead, D = p.shape
    F = 1 + 2 * level
    n_rows = int(np.prod(lead)) if lead else 1
    E = n_rows * D
    lane = 128
    block_rows = max(8, (block_rows // 8) * 8)

    # Lane-dense flat view of the input: (R, 128).  Only the (small) input is
    # ever padded; the 21x larger output is never padded or sliced over.
    flat = p.reshape(-1)
    pad = (-E) % lane
    if pad:
        flat = jnp.pad(flat, (0, pad))
    R = flat.shape[0] // lane
    flat = flat.reshape(R, lane)

    # Row-tile: large (multiple of 8, or the full extent), and >= 2 grid
    # steps when possible so both v7x TensorCores get work.
    if R <= 8:
        tr = R
    else:
        tr = min(block_rows, ((R // 2 + 7) // 8) * 8)
        tr = max(tr, 8)
    grid = pl.cdiv(R, tr)

    slabs = pl.pallas_call(
        functools.partial(_pe_kernel, level=level,
                          recompute_every=recompute_every),
        out_shape=jax.ShapeDtypeStruct((F, R, lane), p.dtype),
        grid=(grid,),
        in_specs=[pl.BlockSpec((tr, lane), lambda i: (i, 0))],
        out_specs=pl.BlockSpec((F, tr, lane), lambda i: (0, i, 0)),
        compiler_params=pltpu.CompilerParams(
            dimension_semantics=("parallel",)),
    )(flat)

    # Final interleave: (F, N, D) -> (N, F, D) -> (..., F*D).
    # One XLA permutation over the output; all other reshapes are free.
    slabs = slabs.reshape(F, R * lane)
    if pad:
        slabs = slabs[:, :E]
    out = jnp.moveaxis(slabs.reshape(F, n_rows, D), 0, 1)
    return out.reshape(*lead, F * D)


def _reference(p: jax.Array, level: int = 10) -> jax.Array:
    p_transformed = jnp.concatenate(
        [jnp.concatenate([jnp.sin((2.0 ** i) * p), jnp.cos((2.0 ** i) * p)],
                         axis=-1) for i in range(level)], axis=-1)
    return jnp.concatenate([p, p_transformed], axis=-1)


if __name__ == "__main__":
    key = jax.random.PRNGKey(0)
    # p: batch of 3-D points, as used by NeRF-style embedders.
    x = jax.random.uniform(key, (2, 128, 3), dtype=jnp.float32,
                           minval=-1.0, maxval=1.0)

    level = 10
    out = jax.block_until_ready(positional_encoding(x, level=level))

    ref = _reference(x, level=level)
    assert out.shape == (2, 128, 3 * (1 + 2 * level)), out.shape
    np.testing.assert_allclose(np.asarray(out), np.asarray(ref),
                               atol=1e-5, rtol=1e-5)
    print("KERNEL_OK")
</pallas_src>

<mosaic_0001>
module attributes {stable_mosaic.version = 11 : i64} {
  func.func @_pe_kernel(%arg0: i32, %arg1: memref<6x128xf32, #tpu.memory_space<vmem>>, %arg2: memref<21x6x128xf32, #tpu.memory_space<vmem>>) attributes {dimension_semantics = [#tpu.dimension_semantics<parallel>], iteration_bounds = array<i64: 1>, scalar_prefetch = 0 : i64, scratch_operands = 0 : i64, tpu.core_type = #tpu.core_type<tc>, window_params = [{transform_indices = @transform_0, window_bounds = array<i64: 6, 128>}, {transform_indices = @transform_1, window_bounds = array<i64: 21, 6, 128>}]} {
    %c0 = arith.constant 0 : index
    %c0_0 = arith.constant 0 : index
    %0 = vector.load %arg1[%c0, %c0_0] : memref<6x128xf32, #tpu.memory_space<vmem>>, vector<6x128xf32>
    %c0_1 = arith.constant 0 : index
    %c0_2 = arith.constant 0 : index
    %c0_3 = arith.constant 0 : index
    %1 = vector.load %arg2[%c0_1, %c0_2, %c0_3] : memref<21x6x128xf32, #tpu.memory_space<vmem>>, vector<1x6x128xf32>
    %2 = vector.shape_cast %1 : vector<1x6x128xf32> to vector<6x128xf32>
    %3 = vector.shape_cast %0 : vector<6x128xf32> to vector<1x6x128xf32>
    tpu.vector_store %arg2[%c0_1, %c0_2, %c0_3], %3 {strides = array<i32>} : memref<21x6x128xf32, #tpu.memory_space<vmem>>, vector<1x6x128xf32>,
    %cst = arith.constant 1.000000e+00 : f32
    %4 = vector.broadcast %cst : f32 to vector<6x128xf32>
    %5 = arith.mulf %0, %4 : vector<6x128xf32>
    %6 = math.sin %5 : vector<6x128xf32>
    %7 = math.cos %5 : vector<6x128xf32>
    %c1 = arith.constant 1 : index
    %c0_4 = arith.constant 0 : index
    %c0_5 = arith.constant 0 : index
    %8 = vector.load %arg2[%c1, %c0_4, %c0_5] : memref<21x6x128xf32, #tpu.memory_space<vmem>>, vector<1x6x128xf32>
    %9 = vector.shape_cast %8 : vector<1x6x128xf32> to vector<6x128xf32>
    %10 = vector.shape_cast %6 : vector<6x128xf32> to vector<1x6x128xf32>
    tpu.vector_store %arg2[%c1, %c0_4, %c0_5], %10 {strides = array<i32>} : memref<21x6x128xf32, #tpu.memory_space<vmem>>, vector<1x6x128xf32>,
    %c2 = arith.constant 2 : index
    %c0_6 = arith.constant 0 : index
    %c0_7 = arith.constant 0 : index
    %11 = vector.load %arg2[%c2, %c0_6, %c0_7] : memref<21x6x128xf32, #tpu.memory_space<vmem>>, vector<1x6x128xf32>
    %12 = vector.shape_cast %11 : vector<1x6x128xf32> to vector<6x128xf32>
    %13 = vector.shape_cast %7 : vector<6x128xf32> to vector<1x6x128xf32>
    tpu.vector_store %arg2[%c2, %c0_6, %c0_7], %13 {strides = array<i32>} : memref<21x6x128xf32, #tpu.memory_space<vmem>>, vector<1x6x128xf32>,
    %14 = arith.mulf %6, %7 : vector<6x128xf32>
    %cst_8 = arith.constant 2.000000e+00 : f32
    %15 = vector.broadcast %cst_8 : f32 to vector<6x128xf32>
    %16 = arith.mulf %15, %14 : vector<6x128xf32>
    %17 = arith.subf %7, %6 : vector<6x128xf32>
    %18 = arith.addf %7, %6 : vector<6x128xf32>
    %19 = arith.mulf %17, %18 : vector<6x128xf32>
    %c3 = arith.constant 3 : index
    %c0_9 = arith.constant 0 : index
    %c0_10 = arith.constant 0 : index
    %20 = vector.load %arg2[%c3, %c0_9, %c0_10] : memref<21x6x128xf32, #tpu.memory_space<vmem>>, vector<1x6x128xf32>
    %21 = vector.shape_cast %20 : vector<1x6x128xf32> to vector<6x128xf32>
    %22 = vector.shape_cast %16 : vector<6x128xf32> to vector<1x6x128xf32>
    tpu.vector_store %arg2[%c3, %c0_9, %c0_10], %22 {strides = array<i32>} : memref<21x6x128xf32, #tpu.memory_space<vmem>>, vector<1x6x128xf32>,
    %c4 = arith.constant 4 : index
    %c0_11 = arith.constant 0 : index
    %c0_12 = arith.constant 0 : index
    %23 = vector.load %arg2[%c4, %c0_11, %c0_12] : memref<21x6x128xf32, #tpu.memory_space<vmem>>, vector<1x6x128xf32>
    %24 = vector.shape_cast %23 : vector<1x6x128xf32> to vector<6x128xf32>
    %25 = vector.shape_cast %19 : vector<6x128xf32> to vector<1x6x128xf32>
    tpu.vector_store %arg2[%c4, %c0_11, %c0_12], %25 {strides = array<i32>} : memref<21x6x128xf32, #tpu.memory_space<vmem>>, vector<1x6x128xf32>,
    %26 = arith.mulf %16, %19 : vector<6x128xf32>
    %cst_13 = arith.constant 2.000000e+00 : f32
    %27 = vector.broadcast %cst_13 : f32 to vector<6x128xf32>
    %28 = arith.mulf %27, %26 : vector<6x128xf32>
    %29 = arith.subf %19, %16 : vector<6x128xf32>
    %30 = arith.addf %19, %16 : vector<6x128xf32>
    %31 = arith.mulf %29, %30 : vector<6x128xf32>
    %c5 = arith.constant 5 : index
    %c0_14 = arith.constant 0 : index
    %c0_15 = arith.constant 0 : index
    %32 = vector.load %arg2[%c5, %c0_14, %c0_15] : memref<21x6x128xf32, #tpu.memory_space<vmem>>, vector<1x6x128xf32>
    %33 = vector.shape_cast %32 : vector<1x6x128xf32> to vector<6x128xf32>
    %34 = vector.shape_cast %28 : vector<6x128xf32> to vector<1x6x128xf32>
    tpu.vector_store %arg2[%c5, %c0_14, %c0_15], %34 {strides = array<i32>} : memref<21x6x128xf32, #tpu.memory_space<vmem>>, vector<1x6x128xf32>,
    %c6 = arith.constant 6 : index
    %c0_16 = arith.constant 0 : index
    %c0_17 = arith.constant 0 : index
    %35 = vector.load %arg2[%c6, %c0_16, %c0_17] : memref<21x6x128xf32, #tpu.memory_space<vmem>>, vector<1x6x128xf32>
    %36 = vector.shape_cast %35 : vector<1x6x128xf32> to vector<6x128xf32>
    %37 = vector.shape_cast %31 : vector<6x128xf32> to vector<1x6x128xf32>
    tpu.vector_store %arg2[%c6, %c0_16, %c0_17], %37 {strides = array<i32>} : memref<21x6x128xf32, #tpu.memory_space<vmem>>, vector<1x6x128xf32>,
    %cst_18 = arith.constant 8.000000e+00 : f32
    %38 = vector.broadcast %cst_18 : f32 to vector<6x128xf32>
    %39 = arith.mulf %0, %38 : vector<6x128xf32>
    %40 = math.sin %39 : vector<6x128xf32>
    %41 = math.cos %39 : vector<6x128xf32>
    %c7 = arith.constant 7 : index
    %c0_19 = arith.constant 0 : index
    %c0_20 = arith.constant 0 : index
    %42 = vector.load %arg2[%c7, %c0_19, %c0_20] : memref<21x6x128xf32, #tpu.memory_space<vmem>>, vector<1x6x128xf32>
    %43 = vector.shape_cast %42 : vector<1x6x128xf32> to vector<6x128xf32>
    %44 = vector.shape_cast %40 : vector<6x128xf32> to vector<1x6x128xf32>
    tpu.vector_store %arg2[%c7, %c0_19, %c0_20], %44 {strides = array<i32>} : memref<21x6x128xf32, #tpu.memory_space<vmem>>, vector<1x6x128xf32>,
    %c8 = arith.constant 8 : index
    %c0_21 = arith.constant 0 : index
    %c0_22 = arith.constant 0 : index
    %45 = vector.load %arg2[%c8, %c0_21, %c0_22] : memref<21x6x128xf32, #tpu.memory_space<vmem>>, vector<1x6x128xf32>
    %46 = vector.shape_cast %45 : vector<1x6x128xf32> to vector<6x128xf32>
    %47 = vector.shape_cast %41 : vector<6x128xf32> to vector<1x6x128xf32>
    tpu.vector_store %arg2[%c8, %c0_21, %c0_22], %47 {strides = array<i32>} : memref<21x6x128xf32, #tpu.memory_space<vmem>>, vector<1x6x128xf32>,
    %48 = arith.mulf %40, %41 : vector<6x128xf32>
    %cst_23 = arith.constant 2.000000e+00 : f32
    %49 = vector.broadcast %cst_23 : f32 to vector<6x128xf32>
    %50 = arith.mulf %49, %48 : vector<6x128xf32>
    %51 = arith.subf %41, %40 : vector<6x128xf32>
    %52 = arith.addf %41, %40 : vector<6x128xf32>
    %53 = arith.mulf %51, %52 : vector<6x128xf32>
    %c9 = arith.constant 9 : index
    %c0_24 = arith.constant 0 : index
    %c0_25 = arith.constant 0 : index
    %54 = vector.load %arg2[%c9, %c0_24, %c0_25] : memref<21x6x128xf32, #tpu.memory_space<vmem>>, vector<1x6x128xf32>
    %55 = vector.shape_cast %54 : vector<1x6x128xf32> to vector<6x128xf32>
    %56 = vector.shape_cast %50 : vector<6x128xf32> to vector<1x6x128xf32>
    tpu.vector_store %arg2[%c9, %c0_24, %c0_25], %56 {strides = array<i32>} : memref<21x6x128xf32, #tpu.memory_space<vmem>>, vector<1x6x128xf32>,
    %c10 = arith.constant 10 : index
    %c0_26 = arith.constant 0 : index
    %c0_27 = arith.constant 0 : index
    %57 = vector.load %arg2[%c10, %c0_26, %c0_27] : memref<21x6x128xf32, #tpu.memory_space<vmem>>, vector<1x6x128xf32>
    %58 = vector.shape_cast %57 : vector<1x6x128xf32> to vector<6x128xf32>
    %59 = vector.shape_cast %53 : vector<6x128xf32> to vector<1x6x128xf32>
    tpu.vector_store %arg2[%c10, %c0_26, %c0_27], %59 {strides = array<i32>} : memref<21x6x128xf32, #tpu.memory_space<vmem>>, vector<1x6x128xf32>,
    %60 = arith.mulf %50, %53 : vector<6x128xf32>
    %cst_28 = arith.constant 2.000000e+00 : f32
    %61 = vector.broadcast %cst_28 : f32 to vector<6x128xf32>
    %62 = arith.mulf %61, %60 : vector<6x128xf32>
    %63 = arith.subf %53, %50 : vector<6x128xf32>
    %64 = arith.addf %53, %50 : vector<6x128xf32>
    %65 = arith.mulf %63, %64 : vector<6x128xf32>
    %c11 = arith.constant 11 : index
    %c0_29 = arith.constant 0 : index
    %c0_30 = arith.constant 0 : index
    %66 = vector.load %arg2[%c11, %c0_29, %c0_30] : memref<21x6x128xf32, #tpu.memory_space<vmem>>, vector<1x6x128xf32>
    %67 = vector.shape_cast %66 : vector<1x6x128xf32> to vector<6x128xf32>
    %68 = vector.shape_cast %62 : vector<6x128xf32> to vector<1x6x128xf32>
    tpu.vector_store %arg2[%c11, %c0_29, %c0_30], %68 {strides = array<i32>} : memref<21x6x128xf32, #tpu.memory_space<vmem>>, vector<1x6x128xf32>,
    %c12 = arith.constant 12 : index
    %c0_31 = arith.constant 0 : index
    %c0_32 = arith.constant 0 : index
    %69 = vector.load %arg2[%c12, %c0_31, %c0_32] : memref<21x6x128xf32, #tpu.memory_space<vmem>>, vector<1x6x128xf32>
    %70 = vector.shape_cast %69 : vector<1x6x128xf32> to vector<6x128xf32>
    %71 = vector.shape_cast %65 : vector<6x128xf32> to vector<1x6x128xf32>
    tpu.vector_store %arg2[%c12, %c0_31, %c0_32], %71 {strides = array<i32>} : memref<21x6x128xf32, #tpu.memory_space<vmem>>, vector<1x6x128xf32>,
    %cst_33 = arith.constant 6.400000e+01 : f32
    %72 = vector.broadcast %cst_33 : f32 to vector<6x128xf32>
    %73 = arith.mulf %0, %72 : vector<6x128xf32>
    %74 = math.sin %73 : vector<6x128xf32>
    %75 = math.cos %73 : vector<6x128xf32>
    %c13 = arith.constant 13 : index
    %c0_34 = arith.constant 0 : index
    %c0_35 = arith.constant 0 : index
    %76 = vector.load %arg2[%c13, %c0_34, %c0_35] : memref<21x6x128xf32, #tpu.memory_space<vmem>>, vector<1x6x128xf32>
    %77 = vector.shape_cast %76 : vector<1x6x128xf32> to vector<6x128xf32>
    %78 = vector.shape_cast %74 : vector<6x128xf32> to vector<1x6x128xf32>
    tpu.vector_store %arg2[%c13, %c0_34, %c0_35], %78 {strides = array<i32>} : memref<21x6x128xf32, #tpu.memory_space<vmem>>, vector<1x6x128xf32>,
    %c14 = arith.constant 14 : index
    %c0_36 = arith.constant 0 : index
    %c0_37 = arith.constant 0 : index
    %79 = vector.load %arg2[%c14, %c0_36, %c0_37] : memref<21x6x128xf32, #tpu.memory_space<vmem>>, vector<1x6x128xf32>
    %80 = vector.shape_cast %79 : vector<1x6x128xf32> to vector<6x128xf32>
    %81 = vector.shape_cast %75 : vector<6x128xf32> to vector<1x6x128xf32>
    tpu.vector_store %arg2[%c14, %c0_36, %c0_37], %81 {strides = array<i32>} : memref<21x6x128xf32, #tpu.memory_space<vmem>>, vector<1x6x128xf32>,
    %82 = arith.mulf %74, %75 : vector<6x128xf32>
    %cst_38 = arith.constant 2.000000e+00 : f32
    %83 = vector.broadcast %cst_38 : f32 to vector<6x128xf32>
    %84 = arith.mulf %83, %82 : vector<6x128xf32>
    %85 = arith.subf %75, %74 : vector<6x128xf32>
    %86 = arith.addf %75, %74 : vector<6x128xf32>
    %87 = arith.mulf %85, %86 : vector<6x128xf32>
    %c15 = arith.constant 15 : index
    %c0_39 = arith.constant 0 : index
    %c0_40 = arith.constant 0 : index
    %88 = vector.load %arg2[%c15, %c0_39, %c0_40] : memref<21x6x128xf32, #tpu.memory_space<vmem>>, vector<1x6x128xf32>
    %89 = vector.shape_cast %88 : vector<1x6x128xf32> to vector<6x128xf32>
    %90 = vector.shape_cast %84 : vector<6x128xf32> to vector<1x6x128xf32>
    tpu.vector_store %arg2[%c15, %c0_39, %c0_40], %90 {strides = array<i32>} : memref<21x6x128xf32, #tpu.memory_space<vmem>>, vector<1x6x128xf32>,
    %c16 = arith.constant 16 : index
    %c0_41 = arith.constant 0 : index
    %c0_42 = arith.constant 0 : index
    %91 = vector.load %arg2[%c16, %c0_41, %c0_42] : memref<21x6x128xf32, #tpu.memory_space<vmem>>, vector<1x6x128xf32>
    %92 = vector.shape_cast %91 : vector<1x6x128xf32> to vector<6x128xf32>
    %93 = vector.shape_cast %87 : vector<6x128xf32> to vector<1x6x128xf32>
    tpu.vector_store %arg2[%c16, %c0_41, %c0_42], %93 {strides = array<i32>} : memref<21x6x128xf32, #tpu.memory_space<vmem>>, vector<1x6x128xf32>,
    %94 = arith.mulf %84, %87 : vector<6x128xf32>
    %cst_43 = arith.constant 2.000000e+00 : f32
    %95 = vector.broadcast %cst_43 : f32 to vector<6x128xf32>
    %96 = arith.mulf %95, %94 : vector<6x128xf32>
    %97 = arith.subf %87, %84 : vector<6x128xf32>
    %98 = arith.addf %87, %84 : vector<6x128xf32>
    %99 = arith.mulf %97, %98 : vector<6x128xf32>
    %c17 = arith.constant 17 : index
    %c0_44 = arith.constant 0 : index
    %c0_45 = arith.constant 0 : index
    %100 = vector.load %arg2[%c17, %c0_44, %c0_45] : memref<21x6x128xf32, #tpu.memory_space<vmem>>, vector<1x6x128xf32>
    %101 = vector.shape_cast %100 : vector<1x6x128xf32> to vector<6x128xf32>
    %102 = vector.shape_cast %96 : vector<6x128xf32> to vector<1x6x128xf32>
    tpu.vector_store %arg2[%c17, %c0_44, %c0_45], %102 {strides = array<i32>} : memref<21x6x128xf32, #tpu.memory_space<vmem>>, vector<1x6x128xf32>,
    %c18 = arith.constant 18 : index
    %c0_46 = arith.constant 0 : index
    %c0_47 = arith.constant 0 : index
    %103 = vector.load %arg2[%c18, %c0_46, %c0_47] : memref<21x6x128xf32, #tpu.memory_space<vmem>>, vector<1x6x128xf32>
    %104 = vector.shape_cast %103 : vector<1x6x128xf32> to vector<6x128xf32>
    %105 = vector.shape_cast %99 : vector<6x128xf32> to vector<1x6x128xf32>
    tpu.vector_store %arg2[%c18, %c0_46, %c0_47], %105 {strides = array<i32>} : memref<21x6x128xf32, #tpu.memory_space<vmem>>, vector<1x6x128xf32>,
    %cst_48 = arith.constant 5.120000e+02 : f32
    %106 = vector.broadcast %cst_48 : f32 to vector<6x128xf32>
    %107 = arith.mulf %0, %106 : vector<6x128xf32>
    %108 = math.sin %107 : vector<6x128xf32>
    %109 = math.cos %107 : vector<6x128xf32>
    %c19 = arith.constant 19 : index
    %c0_49 = arith.constant 0 : index
    %c0_50 = arith.constant 0 : index
    %110 = vector.load %arg2[%c19, %c0_49, %c0_50] : memref<21x6x128xf32, #tpu.memory_space<vmem>>, vector<1x6x128xf32>
    %111 = vector.shape_cast %110 : vector<1x6x128xf32> to vector<6x128xf32>
    %112 = vector.shape_cast %108 : vector<6x128xf32> to vector<1x6x128xf32>
    tpu.vector_store %arg2[%c19, %c0_49, %c0_50], %112 {strides = array<i32>} : memref<21x6x128xf32, #tpu.memory_space<vmem>>, vector<1x6x128xf32>,
    %c20 = arith.constant 20 : index
    %c0_51 = arith.constant 0 : index
    %c0_52 = arith.constant 0 : index
    %113 = vector.load %arg2[%c20, %c0_51, %c0_52] : memref<21x6x128xf32, #tpu.memory_space<vmem>>, vector<1x6x128xf32>
    %114 = vector.shape_cast %113 : vector<1x6x128xf32> to vector<6x128xf32>
    %115 = vector.shape_cast %109 : vector<6x128xf32> to vector<1x6x128xf32>
    tpu.vector_store %arg2[%c20, %c0_51, %c0_52], %115 {strides = array<i32>} : memref<21x6x128xf32, #tpu.memory_space<vmem>>, vector<1x6x128xf32>,
    return
  }
  func.func @transform_0(%arg0: i32) -> (i32, i32) {
    %c0_i32 = arith.constant 0 : i32
    %c0_i32_0 = arith.constant 0 : i32
    return %arg0, %c0_i32 : i32, i32
  }
  func.func @transform_1(%arg0: i32) -> (i32, i32, i32) {
    %c0_i32 = arith.constant 0 : i32
    %c0_i32_0 = arith.constant 0 : i32
    %c0_i32_1 = arith.constant 0 : i32
    return %c0_i32, %arg0, %c0_i32_0 : i32, i32, i32
  }
}

</mosaic_0001>

<llo_original>
// kernel: tpu_custom_call.1
$region0: #{tpu_custom_call.1}
  #allocation0 [shape = 'u32[]', space=smem, size = 0x4, offset = 0x4, fixed_abs, tag = 'smem constant byte address 0x4 - core index']
  #allocation1 [shape = 'u32[144,128]{1,0:T(1,128)}', space=vmem, size = 0x12000, scoped, tag = 'internal scratch']
  %s0 = inlined_call_operand.hbm [shape: f32[6,128], index: 0, kind: input, shape index: {}]
  %s1 = inlined_call_operand.vmem [shape: f32[21,6,128], index: 1, kind: output, shape index: {}]
  %s2 = sld [smem:[#allocation0]]
  $region18: #{tpu_custom_call.1} parent=0
    _
  %s4 = ssub.s32 1, %s2
  %s5 = scalar_select 0, %s4, %s2
  $region1: #{tpu_custom_call.1} parent=0
    #allocation2 [shape = 'u8[4096]{0}', space=vmem, size = 0x1000, scoped, tag = 'input window, operand 0, single buffered']
    #allocation3 [shape = 's32[1]{0}', space=sflag, size = 0x4, scoped, tag = 'scoped memory for tpu_custom_call.1']
    %6 = vsyncpa [#allocation3], 0
    // Predicated region
    $region2: #{tpu_custom_call.1} parent=1 // pred_check
      _
    $region3: #{tpu_custom_call.1} parent=1 // pred_check_branch
      %8 = sbr.rel (0) target = $region5
    $region4: #{tpu_custom_call.1} parent=1 // pred_region
      %s10 = ssub.s32 128, 128
      %11 = vsyncadd [#allocation3], %s10
      %s13 = sshll.u32 [#allocation2], 4
      %s14 = int_to_ptr.vmem [resolvable:$true] %s13
      %16 = dma.hbm_to_vmem [thread:$0]  %s0, 128, %s14, [#allocation3]
    $region5: #{tpu_custom_call.1} parent=1 // pred_fallthru
      _
    // Predicated region
    $region6: #{tpu_custom_call.1} parent=1 // pred_check
      _
    $region7: #{tpu_custom_call.1} parent=1 // pred_check_branch
      %18 = sbr.rel (0) target = $region9
    $region8: #{tpu_custom_call.1} parent=1 // pred_region
      %19 = dma.done [#allocation3], 128
    $region9: #{tpu_custom_call.1} parent=1 // pred_fallthru
      _
    %v20 = vld [vmem:[#allocation2] sm:$0x3f]
    %21 = vst [vmem:[%s1] sm:$0x3f] %v20
    %v22 = vand.u32 2147483647, %v20
    %vm23 = vcmp.le.f32.partialorder %v22, 0.7853982
    %vm24 = vcmp.lt.s32.totalorder %v20, 0
    %v25 = vand.u32 %v20, 2139095040
    %v26 = vshrl.u32 %v25, 23
    %v27 = vsub.s32 %v26, 127
    %v28 = vand.u32 2147483647, %v20
    %v29 = vand.u32 %v28, 8388607
    %v30 = vor.u32 %v29, 8388608
    %v31 = vsub.s32 0, %v30
    %v32 = vadd.s32 %v27, 1
    %vm33 = vcmp.gt.s32.totalorder %v32, 0
    %v34 = vsel %vm33, %v32, 0
    %v35 = vshrl.u32 %v34, 5
    %v36 = vand.u32 %v34, 31
    %v37 = vsub.s32 32, %v36
    %v38 = vshrl.u32 683565275, %v37
    %v39 = vshll.u32 683565275, %v36
    %v40 = vshrl.u32 2475754826, %v37
    %v41 = vor.u32 %v39, %v40
    %v42 = vshll.u32 2475754826, %v36
    %v43 = vshrl.u32 2131351028, %v37
    %v44 = vor.u32 %v42, %v43
    %v45 = vshll.u32 2131351028, %v36
    %v46 = vshrl.u32 2102212464, %v37
    %v47 = vor.u32 %v45, %v46
    %v48 = vshll.u32 2102212464, %v36
    %v49 = vshrl.u32 920167782, %v37
    %v50 = vor.u32 %v48, %v49
    %v51 = vshll.u32 920167782, %v36
    %v52 = vshrl.u32 1326507024, %v37
    %v53 = vor.u32 %v51, %v52
    %vm54 = vcmp.lt.s32.totalorder %v35, 1
    %vm55 = vcmp.lt.s32.totalorder %v35, 2
    %vm56 = vcmp.lt.s32.totalorder %v35, 3
    %vm57 = vcmp.lt.s32.totalorder %v35, 4
    %v58 = vsel %vm54, %v38, %v41
    %v59 = vsel %vm57, %v47, 2102212464
    %v60 = vsel %vm56, %v44, %v59
    %v61 = vsel %vm55, %v58, %v60
    %v62 = vsel %vm54, %v41, %v44
    %v63 = vsel %vm57, %v50, 920167782
    %v64 = vsel %vm56, %v47, %v63
    %v65 = vsel %vm55, %v62, %v64
    %v66 = vsel %vm54, %v44, %v47
    %v67 = vsel %vm57, %v53, 1326507024
    %v68 = vsel %vm56, %v50, %v67
    %v69 = vsel %vm55, %v66, %v68
    %v70 = vshll.u32 %v30, 8
    %v71 = vmul.u32.u64.compose %v70, %v69
    %v72 = vextract.low.u32 %v71
    %v73 = vextract.high.u32 %v71
    %v74 = vmul.u32.u64.compose %v70, %v65
    %v75 = vextract.low.u32 %v74
    %v76 = vextract.high.u32 %v74
    %v77 = vmul.u32 %v70, %v61
    %v78 = vadd.s32 %v73, %v75
    %vm79 = vc.u32 %v73, %v75
    %v80 = vadd.s32 %v76, 1
    %v81 = vsel %vm79, %v80, %v76
    %v82 = vadd.s32 %v77, %v81
    %v83 = vadd.s32 %v82, 536870912
    %v84 = vshrl.u32 %v83, 30
    %v85 = vshll.u32 %v84, 30
    %v86 = vsub.s32 %v82, %v85
    %vm87 = vcmp.lt.s32.totalorder %v86, 0
    %v88 = vsub.s32 0, %v86
    %v89 = vsel %vm87, %v88, %v86
    %v90 = vclz %v89
    %v91 = vsub.s32 %v90, 2
    %vm92 = vcmp.gt.s32.totalorder 0, %v91
    %v93 = vsel %vm92, 0, %v91
    %v94 = vsub.s32 32, %v93
    %v95 = vshll.u32 %v86, %v93
    %v96 = vshrl.u32 %v78, %v94
    %v97 = vor.u32 %v95, %v96
    %v98 = vsub.s32 4294967266, %v93
    %v99 = vadd.s32 %v98, 127
    %v100 = vshll.u32 %v99, 23
    %v101 = vor.u32 4788187, %v100
    %v102 = vand.u32 2147483647, %v101
    %v104 = vcvt.s32.f32 %v97
    %v105 = vmul.f32 %v104, %v102
    %v106 = vxor.u32 %v105, 2147483648
    %v107 = vsel %vm24, %v106, %v105
    %v108 = vsub.s32 4, %v84
    %v109 = vsel %vm24, %v108, %v84
    %v110 = vsel %vm23, %v20, %v107
    %v111 = vsel %vm23, 0, %v109
    %v112 = vcosq.f32.pop %v110
    %v113 = vsinq.f32.pop %v110
    %vm114 = vweird.f32 %v20
    %v115 = vadd.s32 %v111, 3
    %v116 = vand.u32 %v115, 3
    %vm117 = vcmp.lt.s32.totalorder %v116, 2
    %vm118 = vcmp.eq.s32.totalorder %v116, 0
    %v119 = vxor.u32 %v113, 2147483648
    %v120 = vsel %vm118, %v112, %v119
    %vm121 = vcmp.eq.s32.totalorder %v116, 2
    %v122 = vxor.u32 %v112, 2147483648
    %v123 = vsel %vm121, %v122, %v113
    %v124 = vsel %vm117, %v120, %v123
    %v125 = vsel %vm114, nan, %v124
    %v126 = vand.u32 2147483647, %v20
    %vm127 = vcmp.le.f32.partialorder %v126, 0.7853982
    %vm128 = vcmp.lt.s32.totalorder %v20, 0
    %v129 = vand.u32 %v20, 2139095040
    %v130 = vshrl.u32 %v129, 23
    %v131 = vsub.s32 %v130, 127
    %v132 = vand.u32 2147483647, %v20
    %v133 = vand.u32 %v132, 8388607
    %v134 = vor.u32 %v133, 8388608
    %v135 = vsub.s32 0, %v134
    %v136 = vadd.s32 %v131, 1
    %vm137 = vcmp.gt.s32.totalorder %v136, 0
    %v138 = vsel %vm137, %v136, 0
    %v139 = vshrl.u32 %v138, 5
    %v140 = vand.u32 %v138, 31
    %v141 = vsub.s32 32, %v140
    %v142 = vshrl.u32 683565275, %v141
    %v143 = vshll.u32 683565275, %v140
    %v144 = vshrl.u32 2475754826, %v141
    %v145 = vor.u32 %v143, %v144
    %v146 = vshll.u32 2475754826, %v140
    %v147 = vshrl.u32 2131351028, %v141
    %v148 = vor.u32 %v146, %v147
    %v149 = vshll.u32 2131351028, %v140
    %v150 = vshrl.u32 2102212464, %v141
    %v151 = vor.u32 %v149, %v150
    %v152 = vshll.u32 2102212464, %v140
    %v153 = vshrl.u32 920167782, %v141
    %v154 = vor.u32 %v152, %v153
    %v155 = vshll.u32 920167782, %v140
    %v156 = vshrl.u32 1326507024, %v141
    %v157 = vor.u32 %v155, %v156
    %vm158 = vcmp.lt.s32.totalorder %v139, 1
    %vm159 = vcmp.lt.s32.totalorder %v139, 2
    %vm160 = vcmp.lt.s32.totalorder %v139, 3
    %vm161 = vcmp.lt.s32.totalorder %v139, 4
    %v162 = vsel %vm158, %v142, %v145
    %v163 = vsel %vm161, %v151, 2102212464
    %v164 = vsel %vm160, %v148, %v163
    %v165 = vsel %vm159, %v162, %v164
    %v166 = vsel %vm158, %v145, %v148
    %v167 = vsel %vm161, %v154, 920167782
    %v168 = vsel %vm160, %v151, %v167
    %v169 = vsel %vm159, %v166, %v168
    %v170 = vsel %vm158, %v148, %v151
    %v171 = vsel %vm161, %v157, 1326507024
    %v172 = vsel %vm160, %v154, %v171
    %v173 = vsel %vm159, %v170, %v172
    %v174 = vshll.u32 %v134, 8
    %v175 = vmul.u32.u64.compose %v174, %v173
    %v176 = vextract.low.u32 %v175
    %v177 = vextract.high.u32 %v175
    %v178 = vmul.u32.u64.compose %v174, %v169
    %v179 = vextract.low.u32 %v178
    %v180 = vextract.high.u32 %v178
    %v181 = vmul.u32 %v174, %v165
    %v182 = vadd.s32 %v177, %v179
    %vm183 = vc.u32 %v177, %v179
    %v184 = vadd.s32 %v180, 1
    %v185 = vsel %vm183, %v184, %v180
    %v186 = vadd.s32 %v181, %v185
    %v187 = vadd.s32 %v186, 536870912
    %v188 = vshrl.u32 %v187, 30
    %v189 = vshll.u32 %v188, 30
    %v190 = vsub.s32 %v186, %v189
    %vm191 = vcmp.lt.s32.totalorder %v190, 0
    %v192 = vsub.s32 0, %v190
    %v193 = vsel %vm191, %v192, %v190
    %v194 = vclz %v193
    %v195 = vsub.s32 %v194, 2
    %vm196 = vcmp.gt.s32.totalorder 0, %v195
    %v197 = vsel %vm196, 0, %v195
    %v198 = vsub.s32 32, %v197
    %v199 = vshll.u32 %v190, %v197
    %v200 = vshrl.u32 %v182, %v198
    %v201 = vor.u32 %v199, %v200
    %v202 = vsub.s32 4294967266, %v197
    %v203 = vadd.s32 %v202, 127
    %v204 = vshll.u32 %v203, 23
    %v205 = vor.u32 4788187, %v204
    %v206 = vand.u32 2147483647, %v205
    %v208 = vcvt.s32.f32 %v201
    %v209 = vmul.f32 %v208, %v206
    %v210 = vxor.u32 %v209, 2147483648
    %v211 = vsel %vm128, %v210, %v209
    %v212 = vsub.s32 4, %v188
    %v213 = vsel %vm128, %v212, %v188
    %v214 = vsel %vm127, %v20, %v211
    %v215 = vsel %vm127, 0, %v213
    %v216 = vcosq.f32.pop %v214
    %v217 = vsinq.f32.pop %v214
    %vm218 = vweird.f32 %v20
    %v219 = vand.u32 %v215, 3
    %vm220 = vcmp.lt.s32.totalorder %v219, 2
    %vm221 = vcmp.eq.s32.totalorder %v219, 0
    %v222 = vxor.u32 %v217, 2147483648
    %v223 = vsel %vm221, %v216, %v222
    %vm224 = vcmp.eq.s32.totalorder %v219, 2
    %v225 = vxor.u32 %v216, 2147483648
    %v226 = vsel %vm224, %v225, %v217
    %v227 = vsel %vm220, %v223, %v226
    %v228 = vsel %vm218, nan, %v227
    %s229 = scalar_lea.vmem %s1, 8
    %230 = vst [vmem:[%s229] sm:$0x3f] %v125
    %s231 = scalar_lea.vmem %s1, 16
    %232 = vst [vmem:[%s231] sm:$0x3f] %v228
    %v233 = vmul.f32 %v125, %v228
    %v234 = vmul.f32 %v233, 2.0
    %v235 = vsub.f32 %v228, %v125
    %v236 = vadd.f32 %v228, %v125
    %v237 = vmul.f32 %v235, %v236
    %s238 = scalar_lea.vmem %s1, 24
    %239 = vst [vmem:[%s238] sm:$0x3f] %v234
    %s240 = scalar_lea.vmem %s1, 32
    %241 = vst [vmem:[%s240] sm:$0x3f] %v237
    %v242 = vmul.f32 %v234, %v237
    %v243 = vmul.f32 %v242, 2.0
    %v244 = vsub.f32 %v237, %v234
    %v245 = vadd.f32 %v237, %v234
    %v246 = vmul.f32 %v244, %v245
    %s247 = scalar_lea.vmem %s1, 40
    %248 = vst [vmem:[%s247] sm:$0x3f] %v243
    %s249 = scalar_lea.vmem %s1, 48
    %250 = vst [vmem:[%s249] sm:$0x3f] %v246
    %v251 = vmul.f32 %v20, 8.0
    %v252 = vand.u32 2147483647, %v251
    %vm253 = vcmp.le.f32.partialorder %v252, 0.7853982
    %vm254 = vcmp.lt.s32.totalorder %v251, 0
    %v255 = vand.u32 %v251, 2139095040
    %v256 = vshrl.u32 %v255, 23
    %v257 = vsub.s32 %v256, 127
    %v258 = vand.u32 2147483647, %v251
    %v259 = vand.u32 %v258, 8388607
    %v260 = vor.u32 %v259, 8388608
    %v261 = vsub.s32 0, %v260
    %v262 = vadd.s32 %v257, 1
    %vm263 = vcmp.gt.s32.totalorder %v262, 0
    %v264 = vsel %vm263, %v262, 0
    %v265 = vshrl.u32 %v264, 5
    %v266 = vand.u32 %v264, 31
    %v267 = vsub.s32 32, %v266
    %v268 = vshrl.u32 683565275, %v267
    %v269 = vshll.u32 683565275, %v266
    %v270 = vshrl.u32 2475754826, %v267
    %v271 = vor.u32 %v269, %v270
    %v272 = vshll.u32 2475754826, %v266
    %v273 = vshrl.u32 2131351028, %v267
    %v274 = vor.u32 %v272, %v273
    %v275 = vshll.u32 2131351028, %v266
    %v276 = vshrl.u32 2102212464, %v267
    %v277 = vor.u32 %v275, %v276
    %v278 = vshll.u32 2102212464, %v266
    %v279 = vshrl.u32 920167782, %v267
    %v280 = vor.u32 %v278, %v279
    %v281 = vshll.u32 920167782, %v266
    %v282 = vshrl.u32 1326507024, %v267
    %v283 = vor.u32 %v281, %v282
    %vm284 = vcmp.lt.s32.totalorder %v265, 1
    %vm285 = vcmp.lt.s32.totalorder %v265, 2
    %vm286 = vcmp.lt.s32.totalorder %v265, 3
    %vm287 = vcmp.lt.s32.totalorder %v265, 4
    %v288 = vsel %vm284, %v268, %v271
    %v289 = vsel %vm287, %v277, 2102212464
    %v290 = vsel %vm286, %v274, %v289
    %v291 = vsel %vm285, %v288, %v290
    %v292 = vsel %vm284, %v271, %v274
    %v293 = vsel %vm287, %v280, 920167782
    %v294 = vsel %vm286, %v277, %v293
    %v295 = vsel %vm285, %v292, %v294
    %v296 = vsel %vm284, %v274, %v277
    %v297 = vsel %vm287, %v283, 1326507024
    %v298 = vsel %vm286, %v280, %v297
    %v299 = vsel %vm285, %v296, %v298
    %v300 = vshll.u32 %v260, 8
    %v301 = vmul.u32.u64.compose %v300, %v299
    %v302 = vextract.low.u32 %v301
    %v303 = vextract.high.u32 %v301
    %v304 = vmul.u32.u64.compose %v300, %v295
    %v305 = vextract.low.u32 %v304
    %v306 = vextract.high.u32 %v304
    %v307 = vmul.u32 %v300, %v291
    %v308 = vadd.s32 %v303, %v305
    %vm309 = vc.u32 %v303, %v305
    %v310 = vadd.s32 %v306, 1
    %v311 = vsel %vm309, %v310, %v306
    %v312 = vadd.s32 %v307, %v311
    %v313 = vadd.s32 %v312, 536870912
    %v314 = vshrl.u32 %v313, 30
    %v315 = vshll.u32 %v314, 30
    %v316 = vsub.s32 %v312, %v315
    %vm317 = vcmp.lt.s32.totalorder %v316, 0
    %v318 = vsub.s32 0, %v316
    %v319 = vsel %vm317, %v318, %v316
    %v320 = vclz %v319
    %v321 = vsub.s32 %v320, 2
    %vm322 = vcmp.gt.s32.totalorder 0, %v321
    %v323 = vsel %vm322, 0, %v321
    %v324 = vsub.s32 32, %v323
    %v325 = vshll.u32 %v316, %v323
    %v326 = vshrl.u32 %v308, %v324
    %v327 = vor.u32 %v325, %v326
    %v328 = vsub.s32 4294967266, %v323
    %v329 = vadd.s32 %v328, 127
    %v330 = vshll.u32 %v329, 23
    %v331 = vor.u32 4788187, %v330
    %v332 = vand.u32 2147483647, %v331
    %v334 = vcvt.s32.f32 %v327
    %v335 = vmul.f32 %v334, %v332
    %v336 = vxor.u32 %v335, 2147483648
    %v337 = vsel %vm254, %v336, %v335
    %v338 = vsub.s32 4, %v314
    %v339 = vsel %vm254, %v338, %v314
    %v340 = vsel %vm253, %v251, %v337
    %v341 = vsel %vm253, 0, %v339
    %v342 = vcosq.f32.pop %v340
    %v343 = vsinq.f32.pop %v340
    %vm344 = vweird.f32 %v251
    %v345 = vadd.s32 %v341, 3
    %v346 = vand.u32 %v345, 3
    %vm347 = vcmp.lt.s32.totalorder %v346, 2
    %vm348 = vcmp.eq.s32.totalorder %v346, 0
    %v349 = vxor.u32 %v343, 2147483648
    %v350 = vsel %vm348, %v342, %v349
    %vm351 = vcmp.eq.s32.totalorder %v346, 2
    %v352 = vxor.u32 %v342, 2147483648
    %v353 = vsel %vm351, %v352, %v343
    %v354 = vsel %vm347, %v350, %v353
    %v355 = vsel %vm344, nan, %v354
    %v356 = vand.u32 2147483647, %v251
    %vm357 = vcmp.le.f32.partialorder %v356, 0.7853982
    %vm358 = vcmp.lt.s32.totalorder %v251, 0
    %v359 = vand.u32 %v251, 2139095040
    %v360 = vshrl.u32 %v359, 23
    %v361 = vsub.s32 %v360, 127
    %v362 = vand.u32 2147483647, %v251
    %v363 = vand.u32 %v362, 8388607
    %v364 = vor.u32 %v363, 8388608
    %v365 = vsub.s32 0, %v364
    %v366 = vadd.s32 %v361, 1
    %vm367 = vcmp.gt.s32.totalorder %v366, 0
    %v368 = vsel %vm367, %v366, 0
    %v369 = vshrl.u32 %v368, 5
    %v370 = vand.u32 %v368, 31
    %v371 = vsub.s32 32, %v370
    %v372 = vshrl.u32 683565275, %v371
    %v373 = vshll.u32 683565275, %v370
    %v374 = vshrl.u32 2475754826, %v371
    %v375 = vor.u32 %v373, %v374
    %v376 = vshll.u32 2475754826, %v370
    %v377 = vshrl.u32 2131351028, %v371
    %v378 = vor.u32 %v376, %v377
    %v379 = vshll.u32 2131351028, %v370
    %v380 = vshrl.u32 2102212464, %v371
    %v381 = vor.u32 %v379, %v380
    %v382 = vshll.u32 2102212464, %v370
    %v383 = vshrl.u32 920167782, %v371
    %v384 = vor.u32 %v382, %v383
    %v385 = vshll.u32 920167782, %v370
    %v386 = vshrl.u32 1326507024, %v371
    %v387 = vor.u32 %v385, %v386
    %vm388 = vcmp.lt.s32.totalorder %v369, 1
    %vm389 = vcmp.lt.s32.totalorder %v369, 2
    %vm390 = vcmp.lt.s32.totalorder %v369, 3
    %vm391 = vcmp.lt.s32.totalorder %v369, 4
    %v392 = vsel %vm388, %v372, %v375
    %v393 = vsel %vm391, %v381, 2102212464
    %v394 = vsel %vm390, %v378, %v393
    %v395 = vsel %vm389, %v392, %v394
    %v396 = vsel %vm388, %v375, %v378
    %v397 = vsel %vm391, %v384, 920167782
    %v398 = vsel %vm390, %v381, %v397
    %v399 = vsel %vm389, %v396, %v398
    %v400 = vsel %vm388, %v378, %v381
    %v401 = vsel %vm391, %v387, 1326507024
    %v402 = vsel %vm390, %v384, %v401
    %v403 = vsel %vm389, %v400, %v402
    %v404 = vshll.u32 %v364, 8
    %v405 = vmul.u32.u64.compose %v404, %v403
    %v406 = vextract.low.u32 %v405
    %v407 = vextract.high.u32 %v405
    %v408 = vmul.u32.u64.compose %v404, %v399
    %v409 = vextract.low.u32 %v408
    %v410 = vextract.high.u32 %v408
    %v411 = vmul.u32 %v404, %v395
    %v412 = vadd.s32 %v407, %v409
    %vm413 = vc.u32 %v407, %v409
    %v414 = vadd.s32 %v410, 1
    %v415 = vsel %vm413, %v414, %v410
    %v416 = vadd.s32 %v411, %v415
    %v417 = vadd.s32 %v416, 536870912
    %v418 = vshrl.u32 %v417, 30
    %v419 = vshll.u32 %v418, 30
    %v420 = vsub.s32 %v416, %v419
    %vm421 = vcmp.lt.s32.totalorder %v420, 0
    %v422 = vsub.s32 0, %v420
    %v423 = vsel %vm421, %v422, %v420
    %v424 = vclz %v423
    %v425 = vsub.s32 %v424, 2
    %vm426 = vcmp.gt.s32.totalorder 0, %v425
    %v427 = vsel %vm426, 0, %v425
    %v428 = vsub.s32 32, %v427
    %v429 = vshll.u32 %v420, %v427
    %v430 = vshrl.u32 %v412, %v428
    %v431 = vor.u32 %v429, %v430
    %v432 = vsub.s32 4294967266, %v427
    %v433 = vadd.s32 %v432, 127
    %v434 = vshll.u32 %v433, 23
    %v435 = vor.u32 4788187, %v434
    %v436 = vand.u32 2147483647, %v435
    %v438 = vcvt.s32.f32 %v431
    %v439 = vmul.f32 %v438, %v436
    %v440 = vxor.u32 %v439, 2147483648
    %v441 = vsel %vm358, %v440, %v439
    %v442 = vsub.s32 4, %v418
    %v443 = vsel %vm358, %v442, %v418
    %v444 = vsel %vm357, %v251, %v441
    %v445 = vsel %vm357, 0, %v443
    %v446 = vcosq.f32.pop %v444
    %v447 = vsinq.f32.pop %v444
    %vm448 = vweird.f32 %v251
    %v449 = vand.u32 %v445, 3
    %vm450 = vcmp.lt.s32.totalorder %v449, 2
    %vm451 = vcmp.eq.s32.totalorder %v449, 0
    %v452 = vxor.u32 %v447, 2147483648
    %v453 = vsel %vm451, %v446, %v452
    %vm454 = vcmp.eq.s32.totalorder %v449, 2
    %v455 = vxor.u32 %v446, 2147483648
    %v456 = vsel %vm454, %v455, %v447
    %v457 = vsel %vm450, %v453, %v456
    %v458 = vsel %vm448, nan, %v457
    %s459 = scalar_lea.vmem %s1, 56
    %460 = vst [vmem:[%s459] sm:$0x3f] %v355
    %s461 = scalar_lea.vmem %s1, 64
    %462 = vst [vmem:[%s461] sm:$0x3f] %v458
    %v463 = vmul.f32 %v355, %v458
    %v464 = vmul.f32 %v463, 2.0
    %v465 = vsub.f32 %v458, %v355
    %v466 = vadd.f32 %v458, %v355
    %v467 = vmul.f32 %v465, %v466
    %s468 = scalar_lea.vmem %s1, 72
    %469 = vst [vmem:[%s468] sm:$0x3f] %v464
    %s470 = scalar_lea.vmem %s1, 80
    %471 = vst [vmem:[%s470] sm:$0x3f] %v467
    %v472 = vmul.f32 %v464, %v467
    %v473 = vmul.f32 %v472, 2.0
    %v474 = vsub.f32 %v467, %v464
    %v475 = vadd.f32 %v467, %v464
    %v476 = vmul.f32 %v474, %v475
    %s477 = scalar_lea.vmem %s1, 88
    %478 = vst [vmem:[%s477] sm:$0x3f] %v473
    %s479 = scalar_lea.vmem %s1, 96
    %480 = vst [vmem:[%s479] sm:$0x3f] %v476
    %v481 = vmul.f32 %v20, 64.0
    %v482 = vand.u32 2147483647, %v481
    %vm483 = vcmp.le.f32.partialorder %v482, 0.7853982
    %vm484 = vcmp.lt.s32.totalorder %v481, 0
    %v485 = vand.u32 %v481, 2139095040
    %v486 = vshrl.u32 %v485, 23
    %v487 = vsub.s32 %v486, 127
    %v488 = vand.u32 2147483647, %v481
    %v489 = vand.u32 %v488, 8388607
    %v490 = vor.u32 %v489, 8388608
    %v491 = vsub.s32 0, %v490
    %v492 = vadd.s32 %v487, 1
    %vm493 = vcmp.gt.s32.totalorder %v492, 0
    %v494 = vsel %vm493, %v492, 0
    %v495 = vshrl.u32 %v494, 5
    %v496 = vand.u32 %v494, 31
    %v497 = vsub.s32 32, %v496
    %v498 = vshrl.u32 683565275, %v497
    %v499 = vshll.u32 683565275, %v496
    %v500 = vshrl.u32 2475754826, %v497
    %v501 = vor.u32 %v499, %v500
    %v502 = vshll.u32 2475754826, %v496
    %v503 = vshrl.u32 2131351028, %v497
    %v504 = vor.u32 %v502, %v503
    %v505 = vshll.u32 2131351028, %v496
    %v506 = vshrl.u32 2102212464, %v497
    %v507 = vor.u32 %v505, %v506
    %v508 = vshll.u32 2102212464, %v496
    %v509 = vshrl.u32 920167782, %v497
    %v510 = vor.u32 %v508, %v509
    %v511 = vshll.u32 920167782, %v496
    %v512 = vshrl.u32 1326507024, %v497
    %v513 = vor.u32 %v511, %v512
    %vm514 = vcmp.lt.s32.totalorder %v495, 1
    %vm515 = vcmp.lt.s32.totalorder %v495, 2
    %vm516 = vcmp.lt.s32.totalorder %v495, 3
    %vm517 = vcmp.lt.s32.totalorder %v495, 4
    %v518 = vsel %vm514, %v498, %v501
    %v519 = vsel %vm517, %v507, 2102212464
    %v520 = vsel %vm516, %v504, %v519
    %v521 = vsel %vm515, %v518, %v520
    %v522 = vsel %vm514, %v501, %v504
    %v523 = vsel %vm517, %v510, 920167782
    %v524 = vsel %vm516, %v507, %v523
    %v525 = vsel %vm515, %v522, %v524
    %v526 = vsel %vm514, %v504, %v507
    %v527 = vsel %vm517, %v513, 1326507024
    %v528 = vsel %vm516, %v510, %v527
    %v529 = vsel %vm515, %v526, %v528
    %v530 = vshll.u32 %v490, 8
    %v531 = vmul.u32.u64.compose %v530, %v529
    %v532 = vextract.low.u32 %v531
    %v533 = vextract.high.u32 %v531
    %v534 = vmul.u32.u64.compose %v530, %v525
    %v535 = vextract.low.u32 %v534
    %v536 = vextract.high.u32 %v534
    %v537 = vmul.u32 %v530, %v521
    %v538 = vadd.s32 %v533, %v535
    %vm539 = vc.u32 %v533, %v535
    %v540 = vadd.s32 %v536, 1
    %v541 = vsel %vm539, %v540, %v536
    %v542 = vadd.s32 %v537, %v541
    %v543 = vadd.s32 %v542, 536870912
    %v544 = vshrl.u32 %v543, 30
    %v545 = vshll.u32 %v544, 30
    %v546 = vsub.s32 %v542, %v545
    %vm547 = vcmp.lt.s32.totalorder %v546, 0
    %v548 = vsub.s32 0, %v546
    %v549 = vsel %vm547, %v548, %v546
    %v550 = vclz %v549
    %v551 = vsub.s32 %v550, 2
    %vm552 = vcmp.gt.s32.totalorder 0, %v551
    %v553 = vsel %vm552, 0, %v551
    %v554 = vsub.s32 32, %v553
    %v555 = vshll.u32 %v546, %v553
    %v556 = vshrl.u32 %v538, %v554
    %v557 = vor.u32 %v555, %v556
    %v558 = vsub.s32 4294967266, %v553
    %v559 = vadd.s32 %v558, 127
    %v560 = vshll.u32 %v559, 23
    %v561 = vor.u32 4788187, %v560
    %v562 = vand.u32 2147483647, %v561
    %v564 = vcvt.s32.f32 %v557
    %v565 = vmul.f32 %v564, %v562
    %v566 = vxor.u32 %v565, 2147483648
    %v567 = vsel %vm484, %v566, %v565
    %v568 = vsub.s32 4, %v544
    %v569 = vsel %vm484, %v568, %v544
    %v570 = vsel %vm483, %v481, %v567
    %v571 = vsel %vm483, 0, %v569
    %v572 = vcosq.f32.pop %v570
    %v573 = vsinq.f32.pop %v570
    %vm574 = vweird.f32 %v481
    %v575 = vadd.s32 %v571, 3
    %v576 = vand.u32 %v575, 3
    %vm577 = vcmp.lt.s32.totalorder %v576, 2
    %vm578 = vcmp.eq.s32.totalorder %v576, 0
    %v579 = vxor.u32 %v573, 2147483648
    %v580 = vsel %vm578, %v572, %v579
    %vm581 = vcmp.eq.s32.totalorder %v576, 2
    %v582 = vxor.u32 %v572, 2147483648
    %v583 = vsel %vm581, %v582, %v573
    %v584 = vsel %vm577, %v580, %v583
    %v585 = vsel %vm574, nan, %v584
    %v586 = vand.u32 2147483647, %v481
    %vm587 = vcmp.le.f32.partialorder %v586, 0.7853982
    %vm588 = vcmp.lt.s32.totalorder %v481, 0
    %v589 = vand.u32 %v481, 2139095040
    %v590 = vshrl.u32 %v589, 23
    %v591 = vsub.s32 %v590, 127
    %v592 = vand.u32 2147483647, %v481
    %v593 = vand.u32 %v592, 8388607
    %v594 = vor.u32 %v593, 8388608
    %v595 = vsub.s32 0, %v594
    %v596 = vadd.s32 %v591, 1
    %vm597 = vcmp.gt.s32.totalorder %v596, 0
    %v598 = vsel %vm597, %v596, 0
    %v599 = vshrl.u32 %v598, 5
    %v600 = vand.u32 %v598, 31
    %v601 = vsub.s32 32, %v600
    %v602 = vshrl.u32 683565275, %v601
    %v603 = vshll.u32 683565275, %v600
    %v604 = vshrl.u32 2475754826, %v601
    %v605 = vor.u32 %v603, %v604
    %v606 = vshll.u32 2475754826, %v600
    %v607 = vshrl.u32 2131351028, %v601
    %v608 = vor.u32 %v606, %v607
    %v609 = vshll.u32 2131351028, %v600
    %v610 = vshrl.u32 2102212464, %v601
    %v611 = vor.u32 %v609, %v610
    %v612 = vshll.u32 2102212464, %v600
    %v613 = vshrl.u32 920167782, %v601
    %v614 = vor.u32 %v612, %v613
    %v615 = vshll.u32 920167782, %v600
    %v616 = vshrl.u32 1326507024, %v601
    %v617 = vor.u32 %v615, %v616
    %vm618 = vcmp.lt.s32.totalorder %v599, 1
    %vm619 = vcmp.lt.s32.totalorder %v599, 2
    %vm620 = vcmp.lt.s32.totalorder %v599, 3
    %vm621 = vcmp.lt.s32.totalorder %v599, 4
    %v622 = vsel %vm618, %v602, %v605
    %v623 = vsel %vm621, %v611, 2102212464
    %v624 = vsel %vm620, %v608, %v623
    %v625 = vsel %vm619, %v622, %v624
    %v626 = vsel %vm618, %v605, %v608
    %v627 = vsel %vm621, %v614, 920167782
    %v628 = vsel %vm620, %v611, %v627
    %v629 = vsel %vm619, %v626, %v628
    %v630 = vsel %vm618, %v608, %v611
    %v631 = vsel %vm621, %v617, 1326507024
    %v632 = vsel %vm620, %v614, %v631
    %v633 = vsel %vm619, %v630, %v632
    %v634 = vshll.u32 %v594, 8
    %v635 = vmul.u32.u64.compose %v634, %v633
    %v636 = vextract.low.u32 %v635
    %v637 = vextract.high.u32 %v635
    %v638 = vmul.u32.u64.compose %v634, %v629
    %v639 = vextract.low.u32 %v638
    %v640 = vextract.high.u32 %v638
    %v641 = vmul.u32 %v634, %v625
    %v642 = vadd.s32 %v637, %v639
    %vm643 = vc.u32 %v637, %v639
    %v644 = vadd.s32 %v640, 1
    %v645 = vsel %vm643, %v644, %v640
    %v646 = vadd.s32 %v641, %v645
    %v647 = vadd.s32 %v646, 536870912
    %v648 = vshrl.u32 %v647, 30
    %v649 = vshll.u32 %v648, 30
    %v650 = vsub.s32 %v646, %v649
    %vm651 = vcmp.lt.s32.totalorder %v650, 0
    %v652 = vsub.s32 0, %v650
    %v653 = vsel %vm651, %v652, %v650
    %v654 = vclz %v653
    %v655 = vsub.s32 %v654, 2
    %vm656 = vcmp.gt.s32.totalorder 0, %v655
    %v657 = vsel %vm656, 0, %v655
    %v658 = vsub.s32 32, %v657
    %v659 = vshll.u32 %v650, %v657
    %v660 = vshrl.u32 %v642, %v658
    %v661 = vor.u32 %v659, %v660
    %v662 = vsub.s32 4294967266, %v657
    %v663 = vadd.s32 %v662, 127
    %v664 = vshll.u32 %v663, 23
    %v665 = vor.u32 4788187, %v664
    %v666 = vand.u32 2147483647, %v665
    %v668 = vcvt.s32.f32 %v661
    %v669 = vmul.f32 %v668, %v666
    %v670 = vxor.u32 %v669, 2147483648
    %v671 = vsel %vm588, %v670, %v669
    %v672 = vsub.s32 4, %v648
    %v673 = vsel %vm588, %v672, %v648
    %v674 = vsel %vm587, %v481, %v671
    %v675 = vsel %vm587, 0, %v673
    %v676 = vcosq.f32.pop %v674
    %v677 = vsinq.f32.pop %v674
    %vm678 = vweird.f32 %v481
    %v679 = vand.u32 %v675, 3
    %vm680 = vcmp.lt.s32.totalorder %v679, 2
    %vm681 = vcmp.eq.s32.totalorder %v679, 0
    %v682 = vxor.u32 %v677, 2147483648
    %v683 = vsel %vm681, %v676, %v682
    %vm684 = vcmp.eq.s32.totalorder %v679, 2
    %v685 = vxor.u32 %v676, 2147483648
    %v686 = vsel %vm684, %v685, %v677
    %v687 = vsel %vm680, %v683, %v686
    %v688 = vsel %vm678, nan, %v687
    %s689 = scalar_lea.vmem %s1, 104
    %690 = vst [vmem:[%s689] sm:$0x3f] %v585
    %s691 = scalar_lea.vmem %s1, 112
    %692 = vst [vmem:[%s691] sm:$0x3f] %v688
    %v693 = vmul.f32 %v585, %v688
    %v694 = vmul.f32 %v693, 2.0
    %v695 = vsub.f32 %v688, %v585
    %v696 = vadd.f32 %v688, %v585
    %v697 = vmul.f32 %v695, %v696
    %s698 = scalar_lea.vmem %s1, 120
    %699 = vst [vmem:[%s698] sm:$0x3f] %v694
    %s700 = scalar_lea.vmem %s1, 128
    %701 = vst [vmem:[%s700] sm:$0x3f] %v697
    %v702 = vmul.f32 %v694, %v697
    %v703 = vmul.f32 %v702, 2.0
    %v704 = vsub.f32 %v697, %v694
    %v705 = vadd.f32 %v697, %v694
    %v706 = vmul.f32 %v704, %v705
    %s707 = scalar_lea.vmem %s1, 136
    %708 = vst [vmem:[%s707] sm:$0x3f] %v703
    %s709 = scalar_lea.vmem %s1, 144
    %710 = vst [vmem:[%s709] sm:$0x3f] %v706
    %v711 = vmul.f32 %v20, 512.0
    %v712 = vand.u32 2147483647, %v711
    %vm713 = vcmp.le.f32.partialorder %v712, 0.7853982
    %vm714 = vcmp.lt.s32.totalorder %v711, 0
    %v715 = vand.u32 %v711, 2139095040
    %v716 = vshrl.u32 %v715, 23
    %v717 = vsub.s32 %v716, 127
    %v718 = vand.u32 2147483647, %v711
    %v719 = vand.u32 %v718, 8388607
    %v720 = vor.u32 %v719, 8388608
    %v721 = vsub.s32 0, %v720
    %v722 = vadd.s32 %v717, 1
    %vm723 = vcmp.gt.s32.totalorder %v722, 0
    %v724 = vsel %vm723, %v722, 0
    %v725 = vshrl.u32 %v724, 5
    %v726 = vand.u32 %v724, 31
    %v727 = vsub.s32 32, %v726
    %v728 = vshrl.u32 683565275, %v727
    %v729 = vshll.u32 683565275, %v726
    %v730 = vshrl.u32 2475754826, %v727
    %v731 = vor.u32 %v729, %v730
    %v732 = vshll.u32 2475754826, %v726
    %v733 = vshrl.u32 2131351028, %v727
    %v734 = vor.u32 %v732, %v733
    %v735 = vshll.u32 2131351028, %v726
    %v736 = vshrl.u32 2102212464, %v727
    %v737 = vor.u32 %v735, %v736
    %v738 = vshll.u32 2102212464, %v726
    %v739 = vshrl.u32 920167782, %v727
    %v740 = vor.u32 %v738, %v739
    %v741 = vshll.u32 920167782, %v726
    %v742 = vshrl.u32 1326507024, %v727
    %v743 = vor.u32 %v741, %v742
    %vm744 = vcmp.lt.s32.totalorder %v725, 1
    %vm745 = vcmp.lt.s32.totalorder %v725, 2
    %vm746 = vcmp.lt.s32.totalorder %v725, 3
    %vm747 = vcmp.lt.s32.totalorder %v725, 4
    %v748 = vsel %vm744, %v728, %v731
    %v749 = vsel %vm747, %v737, 2102212464
    %v750 = vsel %vm746, %v734, %v749
    %v751 = vsel %vm745, %v748, %v750
    %v752 = vsel %vm744, %v731, %v734
    %v753 = vsel %vm747, %v740, 920167782
    %v754 = vsel %vm746, %v737, %v753
    %v755 = vsel %vm745, %v752, %v754
    %v756 = vsel %vm744, %v734, %v737
    %v757 = vsel %vm747, %v743, 1326507024
    %v758 = vsel %vm746, %v740, %v757
    %v759 = vsel %vm745, %v756, %v758
    %v760 = vshll.u32 %v720, 8
    %v761 = vmul.u32.u64.compose %v760, %v759
    %v762 = vextract.low.u32 %v761
    %v763 = vextract.high.u32 %v761
    %v764 = vmul.u32.u64.compose %v760, %v755
    %v765 = vextract.low.u32 %v764
    %v766 = vextract.high.u32 %v764
    %v767 = vmul.u32 %v760, %v751
    %v768 = vadd.s32 %v763, %v765
    %vm769 = vc.u32 %v763, %v765
    %v770 = vadd.s32 %v766, 1
    %v771 = vsel %vm769, %v770, %v766
    %v772 = vadd.s32 %v767, %v771
    %v773 = vadd.s32 %v772, 536870912
    %v774 = vshrl.u32 %v773, 30
    %v775 = vshll.u32 %v774, 30
    %v776 = vsub.s32 %v772, %v775
    %vm777 = vcmp.lt.s32.totalorder %v776, 0
    %v778 = vsub.s32 0, %v776
    %v779 = vsel %vm777, %v778, %v776
    %v780 = vclz %v779
    %v781 = vsub.s32 %v780, 2
    %vm782 = vcmp.gt.s32.totalorder 0, %v781
    %v783 = vsel %vm782, 0, %v781
    %v784 = vsub.s32 32, %v783
    %v785 = vshll.u32 %v776, %v783
    %v786 = vshrl.u32 %v768, %v784
    %v787 = vor.u32 %v785, %v786
    %v788 = vsub.s32 4294967266, %v783
    %v789 = vadd.s32 %v788, 127
    %v790 = vshll.u32 %v789, 23
    %v791 = vor.u32 4788187, %v790
    %v792 = vand.u32 2147483647, %v791
    %v794 = vcvt.s32.f32 %v787
    %v795 = vmul.f32 %v794, %v792
    %v796 = vxor.u32 %v795, 2147483648
    %v797 = vsel %vm714, %v796, %v795
    %v798 = vsub.s32 4, %v774
    %v799 = vsel %vm714, %v798, %v774
    %v800 = vsel %vm713, %v711, %v797
    %v801 = vsel %vm713, 0, %v799
    %v802 = vcosq.f32.pop %v800
    %v803 = vsinq.f32.pop %v800
    %vm804 = vweird.f32 %v711
    %v805 = vadd.s32 %v801, 3
    %v806 = vand.u32 %v805, 3
    %vm807 = vcmp.lt.s32.totalorder %v806, 2
    %vm808 = vcmp.eq.s32.totalorder %v806, 0
    %v809 = vxor.u32 %v803, 2147483648
    %v810 = vsel %vm808, %v802, %v809
    %vm811 = vcmp.eq.s32.totalorder %v806, 2
    %v812 = vxor.u32 %v802, 2147483648
    %v813 = vsel %vm811, %v812, %v803
    %v814 = vsel %vm807, %v810, %v813
    %v815 = vsel %vm804, nan, %v814
    %v816 = vand.u32 2147483647, %v711
    %vm817 = vcmp.le.f32.partialorder %v816, 0.7853982
    %vm818 = vcmp.lt.s32.totalorder %v711, 0
    %v819 = vand.u32 %v711, 2139095040
    %v820 = vshrl.u32 %v819, 23
    %v821 = vsub.s32 %v820, 127
    %v822 = vand.u32 2147483647, %v711
    %v823 = vand.u32 %v822, 8388607
    %v824 = vor.u32 %v823, 8388608
    %v825 = vsub.s32 0, %v824
    %v826 = vadd.s32 %v821, 1
    %vm827 = vcmp.gt.s32.totalorder %v826, 0
    %v828 = vsel %vm827, %v826, 0
    %v829 = vshrl.u32 %v828, 5
    %v830 = vand.u32 %v828, 31
    %v831 = vsub.s32 32, %v830
    %v832 = vshrl.u32 683565275, %v831
    %v833 = vshll.u32 683565275, %v830
    %v834 = vshrl.u32 2475754826, %v831
    %v835 = vor.u32 %v833, %v834
    %v836 = vshll.u32 2475754826, %v830
    %v837 = vshrl.u32 2131351028, %v831
    %v838 = vor.u32 %v836, %v837
    %v839 = vshll.u32 2131351028, %v830
    %v840 = vshrl.u32 2102212464, %v831
    %v841 = vor.u32 %v839, %v840
    %v842 = vshll.u32 2102212464, %v830
    %v843 = vshrl.u32 920167782, %v831
    %v844 = vor.u32 %v842, %v843
    %v845 = vshll.u32 920167782, %v830
    %v846 = vshrl.u32 1326507024, %v831
    %v847 = vor.u32 %v845, %v846
    %vm848 = vcmp.lt.s32.totalorder %v829, 1
    %vm849 = vcmp.lt.s32.totalorder %v829, 2
    %vm850 = vcmp.lt.s32.totalorder %v829, 3
    %vm851 = vcmp.lt.s32.totalorder %v829, 4
    %v852 = vsel %vm848, %v832, %v835
    %v853 = vsel %vm851, %v841, 2102212464
    %v854 = vsel %vm850, %v838, %v853
    %v855 = vsel %vm849, %v852, %v854
    %v856 = vsel %vm848, %v835, %v838
    %v857 = vsel %vm851, %v844, 920167782
    %v858 = vsel %vm850, %v841, %v857
    %v859 = vsel %vm849, %v856, %v858
    %v860 = vsel %vm848, %v838, %v841
    %v861 = vsel %vm851, %v847, 1326507024
    %v862 = vsel %vm850, %v844, %v861
    %v863 = vsel %vm849, %v860, %v862
    %v864 = vshll.u32 %v824, 8
    %v865 = vmul.u32.u64.compose %v864, %v863
    %v866 = vextract.low.u32 %v865
    %v867 = vextract.high.u32 %v865
    %v868 = vmul.u32.u64.compose %v864, %v859
    %v869 = vextract.low.u32 %v868
    %v870 = vextract.high.u32 %v868
    %v871 = vmul.u32 %v864, %v855
    %v872 = vadd.s32 %v867, %v869
    %vm873 = vc.u32 %v867, %v869
    %v874 = vadd.s32 %v870, 1
    %v875 = vsel %vm873, %v874, %v870
    %v876 = vadd.s32 %v871, %v875
    %v877 = vadd.s32 %v876, 536870912
    %v878 = vshrl.u32 %v877, 30
    %v879 = vshll.u32 %v878, 30
    %v880 = vsub.s32 %v876, %v879
    %vm881 = vcmp.lt.s32.totalorder %v880, 0
    %v882 = vsub.s32 0, %v880
    %v883 = vsel %vm881, %v882, %v880
    %v884 = vclz %v883
    %v885 = vsub.s32 %v884, 2
    %vm886 = vcmp.gt.s32.totalorder 0, %v885
    %v887 = vsel %vm886, 0, %v885
    %v888 = vsub.s32 32, %v887
    %v889 = vshll.u32 %v880, %v887
    %v890 = vshrl.u32 %v872, %v888
    %v891 = vor.u32 %v889, %v890
    %v892 = vsub.s32 4294967266, %v887
    %v893 = vadd.s32 %v892, 127
    %v894 = vshll.u32 %v893, 23
    %v895 = vor.u32 4788187, %v894
    %v896 = vand.u32 2147483647, %v895
    %v898 = vcvt.s32.f32 %v891
    %v899 = vmul.f32 %v898, %v896
    %v900 = vxor.u32 %v899, 2147483648
    %v901 = vsel %vm818, %v900, %v899
    %v902 = vsub.s32 4, %v878
    %v903 = vsel %vm818, %v902, %v878
    %v904 = vsel %vm817, %v711, %v901
    %v905 = vsel %vm817, 0, %v903
    %v906 = vcosq.f32.pop %v904
    %v907 = vsinq.f32.pop %v904
    %vm908 = vweird.f32 %v711
    %v909 = vand.u32 %v905, 3
    %vm910 = vcmp.lt.s32.totalorder %v909, 2
    %vm911 = vcmp.eq.s32.totalorder %v909, 0
    %v912 = vxor.u32 %v907, 2147483648
    %v913 = vsel %vm911, %v906, %v912
    %vm914 = vcmp.eq.s32.totalorder %v909, 2
    %v915 = vxor.u32 %v906, 2147483648
    %v916 = vsel %vm914, %v915, %v907
    %v917 = vsel %vm910, %v913, %v916
    %v918 = vsel %vm908, nan, %v917
    %s919 = scalar_lea.vmem %s1, 152
    %920 = vst [vmem:[%s919] sm:$0x3f] %v815
    %s921 = scalar_lea.vmem %s1, 160
    %922 = vst [vmem:[%s921] sm:$0x3f] %v918
    // Predicated region
    $region10: #{tpu_custom_call.1} parent=1 // pred_check
      _
    $region11: #{tpu_custom_call.1} parent=1 // pred_check_branch
      %924 = sbr.rel (0) target = $region13
    $region12: #{tpu_custom_call.1} parent=1 // pred_region
      _
    $region13: #{tpu_custom_call.1} parent=1 // pred_fallthru
      _
    // Predicated region
    $region14: #{tpu_custom_call.1} parent=1 // pred_check
      _
    $region15: #{tpu_custom_call.1} parent=1 // pred_check_branch
      %926 = sbr.rel (0) target = $region17
    $region16: #{tpu_custom_call.1} parent=1 // pred_region
      _
    $region17: #{tpu_custom_call.1} parent=1 // pred_fallthru
      _
    %927 = vsyncpa [#allocation3], 1

</llo_original>
